<compile_context>
chip_gen: v5e
topology: v5e:2x2
jax: 0.10.0
libtpu: 0.0.40
codegen_flags: <defaults>
</compile_context>

<pallas_src>
import math

import jax
import jax.numpy as jnp
from jax.experimental import pallas as pl
from jax.experimental.pallas import tpu as pltpu

# ---- model hyper-parameters (small, consistent with the module) ----
B = 2          # batch
S = 8          # sequence length
D = 32         # d_model
H = 4          # num_heads
DK = D // H    # d_k
F = 64         # d_ff
M = B * S      # flattened rows
LN_EPS = 1e-5  # nn.LayerNorm default


def _layernorm(x, gamma, beta):
    # PyTorch LayerNorm: biased variance over last dim
    mean = jnp.mean(x, axis=-1, keepdims=True)
    var = jnp.mean((x - mean) ** 2, axis=-1, keepdims=True)
    return (x - mean) * jax.lax.rsqrt(var + LN_EPS) * gamma + beta


def encoder_layer_kernel(x_ref, wqkv_ref, bqkv_ref, wo_ref, w1_ref, b1_ref,
                         w2_ref, pb_ref, o_ref):
    """One grid step processes one batch element's (S, D) activation slice.

    pb_ref rows: 0 b_o | 1 gamma1 | 2 beta1 | 3 gamma2 | 4 beta2 | 5 b2
    The 1/sqrt(d_k) attention scale is pre-folded into the Q columns of wqkv / bqkv.
    """
    x = x_ref[...]            # (S, D) f32
    pb = pb_ref[...]          # (6, D) f32

    # ---- fused Q|K|V projection: one MXU push, one (1, 3D) bias add ----
    qkv = jnp.dot(x, wqkv_ref[...], preferred_element_type=jnp.float32) + bqkv_ref[...]
    q = qkv[:, 0 * D:1 * D]   # already scaled by 1/sqrt(d_k)
    k = qkv[:, 1 * D:2 * D]
    v = qkv[:, 2 * D:3 * D]

    # ---- per-batch multi-head self-attention with fused output projection ----
    acc = jnp.zeros((S, D), jnp.float32)
    for h in range(H):                      # static unroll over heads
        sl = slice(h * DK, (h + 1) * DK)
        qh, kh, vh = q[:, sl], k[:, sl], v[:, sl]
        # q @ k^T without materializing a transpose (contract both on their last dim)
        scores = jax.lax.dot_general(
            qh, kh, dimension_numbers=(((1,), (1,)), ((), ())),
            preferred_element_type=jnp.float32)                        # (S, S)
        # softmax exactly as in the PyTorch module: exp(s - max) / (sum(exp) + 1e-9)
        s_max = jnp.max(scores, axis=-1, keepdims=True)
        exp_s = jnp.exp(scores - s_max)
        denom = jnp.sum(exp_s, axis=-1, keepdims=True) + 1e-9
        attn_w = exp_s / denom                                          # exact f32 division
        oh = jnp.dot(attn_w, vh, preferred_element_type=jnp.float32)    # (S, DK)
        # head-concat + W_o fused: accumulate oh @ W_o[h*DK:(h+1)*DK, :]
        acc = acc + jnp.dot(oh, wo_ref[sl, :], preferred_element_type=jnp.float32)

    attn_out = acc + pb[0:1]                                    # + b_o

    # ---- residual + LayerNorm 1 ----
    x1 = _layernorm(x + attn_out, pb[1:2], pb[2:3])             # (S, D)

    # ---- feed-forward ----
    h1 = jnp.dot(x1, w1_ref[...], preferred_element_type=jnp.float32) + b1_ref[...]  # (S, F)
    h1 = jnp.maximum(h1, 0.0)                                                         # ReLU
    ff = jnp.dot(h1, w2_ref[...], preferred_element_type=jnp.float32) + pb[5:6]       # (S, D)

    # ---- residual + LayerNorm 2 ----
    o_ref[...] = _layernorm(x1 + ff, pb[3:4], pb[4:5]).astype(o_ref.dtype)


@jax.jit
def encoder_layer(x, params):
    (wq, bq, wk, bk, wv, bv, wo, bo, w1, b1, w2, b2, g1, be1, g2, be2) = params
    inv_scale = 1.0 / math.sqrt(DK)

    # fuse Q/K/V projection weights + biases; fold the softmax scale into Q columns / b_q
    wqkv = jnp.concatenate([wq * inv_scale, wk, wv], axis=1)                 # (D, 3D)
    bqkv = jnp.concatenate([bq * inv_scale, bk, bv], axis=1)                 # (1, 3D)
    # pack the remaining (1, D) params into one block: b_o, g1, be1, g2, be2, b2
    pblock = jnp.concatenate([bo, g1, be1, g2, be2, b2], axis=0)             # (6, D)

    x2d = x.reshape(M, D)

    # advisory cost estimate so XLA schedules around the custom call
    flops_per_b = (
        2 * S * D * (3 * D)                              # fused QKV projection
        + H * (2 * S * S * DK + 2 * S * S * DK + 2 * S * DK * D)  # scores, attn@V, W_o slice
        + 2 * S * D * F + 2 * S * F * D                  # feed-forward
    )
    cost = pl.CostEstimate(
        flops=B * flops_per_b,
        transcendentals=B * (H * S * S + 2 * S),         # exp + rsqrt
        bytes_accessed=4 * (2 * M * D + wqkv.size + bqkv.size + wo.size
                            + w1.size + b1.size + w2.size + pblock.size),
    )

    out2d = pl.pallas_call(
        encoder_layer_kernel,
        out_shape=jax.ShapeDtypeStruct((M, D), jnp.float32),
        grid=(B,),
        in_specs=[
            pl.BlockSpec((S, D), lambda b: (b, 0)),        # x       (per-batch row block)
            pl.BlockSpec((D, 3 * D), lambda b: (0, 0)),    # wqkv    (resident)
            pl.BlockSpec((1, 3 * D), lambda b: (0, 0)),    # bqkv    (resident)
            pl.BlockSpec((D, D), lambda b: (0, 0)),        # wo      (resident)
            pl.BlockSpec((D, F), lambda b: (0, 0)),        # w1      (resident)
            pl.BlockSpec((1, F), lambda b: (0, 0)),        # b1      (resident)
            pl.BlockSpec((F, D), lambda b: (0, 0)),        # w2      (resident)
            pl.BlockSpec((6, D), lambda b: (0, 0)),        # pblock  (resident)
        ],
        out_specs=pl.BlockSpec((S, D), lambda b: (b, 0)),
        compiler_params=pltpu.CompilerParams(dimension_semantics=("parallel",)),
        cost_estimate=cost,
    )(x2d, wqkv, bqkv, wo, w1, b1, w2, pblock)
    return out2d.reshape(B, S, D)


# ---------------- deterministic parameter init ----------------
def xavier_uniform(key, shape):
    fan_in, fan_out = shape
    limit = math.sqrt(6.0 / (fan_in + fan_out))
    return jax.random.uniform(key, shape, jnp.float32, -limit, limit)


def make_params(key):
    ks = jax.random.split(key, 8)
    # attention projections: xavier_uniform weights, zero biases (as in the module's __init__)
    wq = xavier_uniform(ks[0], (D, D)); bq = jnp.zeros((1, D), jnp.float32)
    wk = xavier_uniform(ks[1], (D, D)); bk = jnp.zeros((1, D), jnp.float32)
    wv = xavier_uniform(ks[2], (D, D)); bv = jnp.zeros((1, D), jnp.float32)
    wo = xavier_uniform(ks[3], (D, D)); bo = jnp.zeros((1, D), jnp.float32)
    # feed-forward linears (deterministic uniform init, PyTorch-Linear-style bounds)
    lim1 = 1.0 / math.sqrt(D)
    w1 = jax.random.uniform(ks[4], (D, F), jnp.float32, -lim1, lim1)
    b1 = jax.random.uniform(ks[5], (1, F), jnp.float32, -lim1, lim1)
    lim2 = 1.0 / math.sqrt(F)
    w2 = jax.random.uniform(ks[6], (F, D), jnp.float32, -lim2, lim2)
    b2 = jax.random.uniform(ks[7], (1, D), jnp.float32, -lim2, lim2)
    # layer norms: default init (ones / zeros)
    g1 = jnp.ones((1, D), jnp.float32); be1 = jnp.zeros((1, D), jnp.float32)
    g2 = jnp.ones((1, D), jnp.float32); be2 = jnp.zeros((1, D), jnp.float32)
    return (wq, bq, wk, bk, wv, bv, wo, bo, w1, b1, w2, b2, g1, be1, g2, be2)


# ---------------- pure-JAX reference (for correctness check) ----------------
def encoder_layer_ref(x, params):
    (wq, bq, wk, bk, wv, bv, wo, bo, w1, b1, w2, b2, g1, be1, g2, be2) = params
    with jax.default_matmul_precision("float32"):
        q = x @ wq + bq
        k = x @ wk + bk
        v = x @ wv + bv
        def split(t):  # (B,S,D) -> (B,H,S,DK)
            return t.reshape(B, S, H, DK).transpose(0, 2, 1, 3)
        qh, kh, vh = split(q), split(k), split(v)
        scores = jnp.einsum("bhqd,bhkd->bhqk", qh, kh) / math.sqrt(DK)
        s_max = jnp.max(scores, axis=-1, keepdims=True)
        exp_s = jnp.exp(scores - s_max)
        attn_w = exp_s / (jnp.sum(exp_s, axis=-1, keepdims=True) + 1e-9)
        attn = jnp.einsum("bhqk,bhkd->bhqd", attn_w, vh)
        attn = attn.transpose(0, 2, 1, 3).reshape(B, S, D) @ wo + bo
        x1 = _layernorm(x + attn, g1, be1)
        ff = jnp.maximum(x1 @ w1 + b1, 0.0) @ w2 + b2
        return _layernorm(x1 + ff, g2, be2)


if __name__ == "__main__":
    key = jax.random.PRNGKey(0)
    kx, kp = jax.random.split(key)
    x = jax.random.normal(kx, (B, S, D), jnp.float32)
    params = make_params(kp)

    out = encoder_layer(x, params)
    out = jax.block_until_ready(out)

    ref = encoder_layer_ref(x, params)
    assert out.shape == (B, S, D)
    # exact f32 division in the softmax (no approx reciprocal) -> tight agreement
    assert jnp.allclose(out, ref, atol=2e-4, rtol=2e-4), "mismatch vs JAX reference"

    # TODO(synk): optional attention `mask` argument not implemented (default mask=None path only);
    # dropout layers are identity (eval mode).
    print("KERNEL_OK")
</pallas_src>

<mosaic_0001>
module attributes {stable_mosaic.version = 11 : i64} {
  func.func @encoder_layer_kernel(%arg0: i32, %arg1: memref<8x32xf32, #tpu.memory_space<vmem>>, %arg2: memref<32x96xf32, #tpu.memory_space<vmem>>, %arg3: memref<1x96xf32, #tpu.memory_space<vmem>>, %arg4: memref<32x32xf32, #tpu.memory_space<vmem>>, %arg5: memref<32x64xf32, #tpu.memory_space<vmem>>, %arg6: memref<1x64xf32, #tpu.memory_space<vmem>>, %arg7: memref<64x32xf32, #tpu.memory_space<vmem>>, %arg8: memref<6x32xf32, #tpu.memory_space<vmem>>, %arg9: memref<8x32xf32, #tpu.memory_space<vmem>>) attributes {dimension_semantics = [#tpu.dimension_semantics<parallel>], iteration_bounds = array<i64: 2>, scalar_prefetch = 0 : i64, scratch_operands = 0 : i64, tpu.core_type = #tpu.core_type<tc>, window_params = [{transform_indices = @transform_0, window_bounds = array<i64: 8, 32>}, {pipeline_mode = #tpu.pipeline_mode<synchronous>, transform_indices = @transform_1, window_bounds = array<i64: 32, 96>}, {pipeline_mode = #tpu.pipeline_mode<synchronous>, transform_indices = @transform_2, window_bounds = array<i64: 1, 96>}, {pipeline_mode = #tpu.pipeline_mode<synchronous>, transform_indices = @transform_3, window_bounds = array<i64: 32, 32>}, {pipeline_mode = #tpu.pipeline_mode<synchronous>, transform_indices = @transform_4, window_bounds = array<i64: 32, 64>}, {pipeline_mode = #tpu.pipeline_mode<synchronous>, transform_indices = @transform_5, window_bounds = array<i64: 1, 64>}, {pipeline_mode = #tpu.pipeline_mode<synchronous>, transform_indices = @transform_6, window_bounds = array<i64: 64, 32>}, {pipeline_mode = #tpu.pipeline_mode<synchronous>, transform_indices = @transform_7, window_bounds = array<i64: 6, 32>}, {transform_indices = @transform_8, window_bounds = array<i64: 8, 32>}]} {
    %c0 = arith.constant 0 : index
    %c0_0 = arith.constant 0 : index
    %0 = vector.load %arg1[%c0, %c0_0] : memref<8x32xf32, #tpu.memory_space<vmem>>, vector<8x32xf32>
    %c0_1 = arith.constant 0 : index
    %c0_2 = arith.constant 0 : index
    %1 = vector.load %arg8[%c0_1, %c0_2] : memref<6x32xf32, #tpu.memory_space<vmem>>, vector<6x32xf32>
    %c0_3 = arith.constant 0 : index
    %c0_4 = arith.constant 0 : index
    %2 = vector.load %arg2[%c0_3, %c0_4] : memref<32x96xf32, #tpu.memory_space<vmem>>, vector<32x96xf32>
    %cst = arith.constant dense<0.000000e+00> : vector<8x96xf32>
    %3 = tpu.matmul %0, %2, %cst {dimension_numbers = #tpu.dot_dimension_numbers<[1], [0], [0], [1], [0, 0, 1, 1], [], []>} : vector<8x32xf32>, vector<32x96xf32>, vector<8x96xf32> -> vector<8x96xf32>
    %c0_5 = arith.constant 0 : index
    %c0_6 = arith.constant 0 : index
    %4 = vector.load %arg3[%c0_5, %c0_6] : memref<1x96xf32, #tpu.memory_space<vmem>>, vector<1x96xf32>
    %5 = vector.broadcast %4 : vector<1x96xf32> to vector<8x96xf32>
    %6 = arith.addf %3, %5 : vector<8x96xf32>
    %7 = vector.extract_strided_slice %6 {offsets = [0, 0], sizes = [8, 32], strides = [1, 1]} : vector<8x96xf32> to vector<8x32xf32>
    %8 = vector.extract_strided_slice %6 {offsets = [0, 32], sizes = [8, 32], strides = [1, 1]} : vector<8x96xf32> to vector<8x32xf32>
    %9 = vector.extract_strided_slice %6 {offsets = [0, 64], sizes = [8, 32], strides = [1, 1]} : vector<8x96xf32> to vector<8x32xf32>
    %cst_7 = arith.constant 0.000000e+00 : f32
    %10 = vector.broadcast %cst_7 : f32 to vector<8x32xf32>
    %11 = vector.extract_strided_slice %7 {offsets = [0, 0], sizes = [8, 8], strides = [1, 1]} : vector<8x32xf32> to vector<8x8xf32>
    %12 = vector.extract_strided_slice %8 {offsets = [0, 0], sizes = [8, 8], strides = [1, 1]} : vector<8x32xf32> to vector<8x8xf32>
    %13 = vector.extract_strided_slice %9 {offsets = [0, 0], sizes = [8, 8], strides = [1, 1]} : vector<8x32xf32> to vector<8x8xf32>
    %cst_8 = arith.constant dense<0.000000e+00> : vector<8x8xf32>
    %14 = tpu.matmul %11, %12, %cst_8 {dimension_numbers = #tpu.dot_dimension_numbers<[1], [1], [0], [0], [0, 0, 1, 0], [], []>} : vector<8x8xf32>, vector<8x8xf32>, vector<8x8xf32> -> vector<8x8xf32>
    %cst_9 = arith.constant dense<0xFF800000> : vector<8xf32>
    %15 = vector.multi_reduction <maximumf>, %14, %cst_9 [1] : vector<8x8xf32> to vector<8xf32>
    %16 = vector.shape_cast %15 : vector<8xf32> to vector<8x1xf32>
    %17 = vector.broadcast %16 : vector<8x1xf32> to vector<8x8xf32>
    %18 = arith.subf %14, %17 : vector<8x8xf32>
    %19 = math.exp %18 : vector<8x8xf32>
    %cst_10 = arith.constant dense<0.000000e+00> : vector<8xf32>
    %20 = vector.multi_reduction <add>, %19, %cst_10 [1] : vector<8x8xf32> to vector<8xf32>
    %21 = vector.shape_cast %20 : vector<8xf32> to vector<8x1xf32>
    %cst_11 = arith.constant 9.99999971E-10 : f32
    %22 = vector.broadcast %cst_11 : f32 to vector<8x1xf32>
    %23 = arith.addf %21, %22 : vector<8x1xf32>
    %24 = vector.broadcast %23 : vector<8x1xf32> to vector<8x8xf32>
    %25 = arith.divf %19, %24 : vector<8x8xf32>
    %cst_12 = arith.constant dense<0.000000e+00> : vector<8x8xf32>
    %26 = tpu.matmul %25, %13, %cst_12 {dimension_numbers = #tpu.dot_dimension_numbers<[1], [0], [0], [1], [0, 0, 1, 1], [], []>} : vector<8x8xf32>, vector<8x8xf32>, vector<8x8xf32> -> vector<8x8xf32>
    %c0_13 = arith.constant 0 : index
    %c0_14 = arith.constant 0 : index
    %27 = vector.load %arg4[%c0_13, %c0_14] : memref<32x32xf32, #tpu.memory_space<vmem>>, vector<8x32xf32>
    %cst_15 = arith.constant dense<0.000000e+00> : vector<8x32xf32>
    %28 = tpu.matmul %26, %27, %cst_15 {dimension_numbers = #tpu.dot_dimension_numbers<[1], [0], [0], [1], [0, 0, 1, 1], [], []>} : vector<8x8xf32>, vector<8x32xf32>, vector<8x32xf32> -> vector<8x32xf32>
    %29 = arith.addf %10, %28 : vector<8x32xf32>
    %30 = vector.extract_strided_slice %7 {offsets = [0, 8], sizes = [8, 8], strides = [1, 1]} : vector<8x32xf32> to vector<8x8xf32>
    %31 = vector.extract_strided_slice %8 {offsets = [0, 8], sizes = [8, 8], strides = [1, 1]} : vector<8x32xf32> to vector<8x8xf32>
    %32 = vector.extract_strided_slice %9 {offsets = [0, 8], sizes = [8, 8], strides = [1, 1]} : vector<8x32xf32> to vector<8x8xf32>
    %cst_16 = arith.constant dense<0.000000e+00> : vector<8x8xf32>
    %33 = tpu.matmul %30, %31, %cst_16 {dimension_numbers = #tpu.dot_dimension_numbers<[1], [1], [0], [0], [0, 0, 1, 0], [], []>} : vector<8x8xf32>, vector<8x8xf32>, vector<8x8xf32> -> vector<8x8xf32>
    %cst_17 = arith.constant dense<0xFF800000> : vector<8xf32>
    %34 = vector.multi_reduction <maximumf>, %33, %cst_17 [1] : vector<8x8xf32> to vector<8xf32>
    %35 = vector.shape_cast %34 : vector<8xf32> to vector<8x1xf32>
    %36 = vector.broadcast %35 : vector<8x1xf32> to vector<8x8xf32>
    %37 = arith.subf %33, %36 : vector<8x8xf32>
    %38 = math.exp %37 : vector<8x8xf32>
    %cst_18 = arith.constant dense<0.000000e+00> : vector<8xf32>
    %39 = vector.multi_reduction <add>, %38, %cst_18 [1] : vector<8x8xf32> to vector<8xf32>
    %40 = vector.shape_cast %39 : vector<8xf32> to vector<8x1xf32>
    %cst_19 = arith.constant 9.99999971E-10 : f32
    %41 = vector.broadcast %cst_19 : f32 to vector<8x1xf32>
    %42 = arith.addf %40, %41 : vector<8x1xf32>
    %43 = vector.broadcast %42 : vector<8x1xf32> to vector<8x8xf32>
    %44 = arith.divf %38, %43 : vector<8x8xf32>
    %cst_20 = arith.constant dense<0.000000e+00> : vector<8x8xf32>
    %45 = tpu.matmul %44, %32, %cst_20 {dimension_numbers = #tpu.dot_dimension_numbers<[1], [0], [0], [1], [0, 0, 1, 1], [], []>} : vector<8x8xf32>, vector<8x8xf32>, vector<8x8xf32> -> vector<8x8xf32>
    %c8 = arith.constant 8 : index
    %c0_21 = arith.constant 0 : index
    %46 = vector.load %arg4[%c8, %c0_21] : memref<32x32xf32, #tpu.memory_space<vmem>>, vector<8x32xf32>
    %cst_22 = arith.constant dense<0.000000e+00> : vector<8x32xf32>
    %47 = tpu.matmul %45, %46, %cst_22 {dimension_numbers = #tpu.dot_dimension_numbers<[1], [0], [0], [1], [0, 0, 1, 1], [], []>} : vector<8x8xf32>, vector<8x32xf32>, vector<8x32xf32> -> vector<8x32xf32>
    %48 = arith.addf %29, %47 : vector<8x32xf32>
    %49 = vector.extract_strided_slice %7 {offsets = [0, 16], sizes = [8, 8], strides = [1, 1]} : vector<8x32xf32> to vector<8x8xf32>
    %50 = vector.extract_strided_slice %8 {offsets = [0, 16], sizes = [8, 8], strides = [1, 1]} : vector<8x32xf32> to vector<8x8xf32>
    %51 = vector.extract_strided_slice %9 {offsets = [0, 16], sizes = [8, 8], strides = [1, 1]} : vector<8x32xf32> to vector<8x8xf32>
    %cst_23 = arith.constant dense<0.000000e+00> : vector<8x8xf32>
    %52 = tpu.matmul %49, %50, %cst_23 {dimension_numbers = #tpu.dot_dimension_numbers<[1], [1], [0], [0], [0, 0, 1, 0], [], []>} : vector<8x8xf32>, vector<8x8xf32>, vector<8x8xf32> -> vector<8x8xf32>
    %cst_24 = arith.constant dense<0xFF800000> : vector<8xf32>
    %53 = vector.multi_reduction <maximumf>, %52, %cst_24 [1] : vector<8x8xf32> to vector<8xf32>
    %54 = vector.shape_cast %53 : vector<8xf32> to vector<8x1xf32>
    %55 = vector.broadcast %54 : vector<8x1xf32> to vector<8x8xf32>
    %56 = arith.subf %52, %55 : vector<8x8xf32>
    %57 = math.exp %56 : vector<8x8xf32>
    %cst_25 = arith.constant dense<0.000000e+00> : vector<8xf32>
    %58 = vector.multi_reduction <add>, %57, %cst_25 [1] : vector<8x8xf32> to vector<8xf32>
    %59 = vector.shape_cast %58 : vector<8xf32> to vector<8x1xf32>
    %cst_26 = arith.constant 9.99999971E-10 : f32
    %60 = vector.broadcast %cst_26 : f32 to vector<8x1xf32>
    %61 = arith.addf %59, %60 : vector<8x1xf32>
    %62 = vector.broadcast %61 : vector<8x1xf32> to vector<8x8xf32>
    %63 = arith.divf %57, %62 : vector<8x8xf32>
    %cst_27 = arith.constant dense<0.000000e+00> : vector<8x8xf32>
    %64 = tpu.matmul %63, %51, %cst_27 {dimension_numbers = #tpu.dot_dimension_numbers<[1], [0], [0], [1], [0, 0, 1, 1], [], []>} : vector<8x8xf32>, vector<8x8xf32>, vector<8x8xf32> -> vector<8x8xf32>
    %c16 = arith.constant 16 : index
    %c0_28 = arith.constant 0 : index
    %65 = vector.load %arg4[%c16, %c0_28] : memref<32x32xf32, #tpu.memory_space<vmem>>, vector<8x32xf32>
    %cst_29 = arith.constant dense<0.000000e+00> : vector<8x32xf32>
    %66 = tpu.matmul %64, %65, %cst_29 {dimension_numbers = #tpu.dot_dimension_numbers<[1], [0], [0], [1], [0, 0, 1, 1], [], []>} : vector<8x8xf32>, vector<8x32xf32>, vector<8x32xf32> -> vector<8x32xf32>
    %67 = arith.addf %48, %66 : vector<8x32xf32>
    %68 = vector.extract_strided_slice %7 {offsets = [0, 24], sizes = [8, 8], strides = [1, 1]} : vector<8x32xf32> to vector<8x8xf32>
    %69 = vector.extract_strided_slice %8 {offsets = [0, 24], sizes = [8, 8], strides = [1, 1]} : vector<8x32xf32> to vector<8x8xf32>
    %70 = vector.extract_strided_slice %9 {offsets = [0, 24], sizes = [8, 8], strides = [1, 1]} : vector<8x32xf32> to vector<8x8xf32>
    %cst_30 = arith.constant dense<0.000000e+00> : vector<8x8xf32>
    %71 = tpu.matmul %68, %69, %cst_30 {dimension_numbers = #tpu.dot_dimension_numbers<[1], [1], [0], [0], [0, 0, 1, 0], [], []>} : vector<8x8xf32>, vector<8x8xf32>, vector<8x8xf32> -> vector<8x8xf32>
    %cst_31 = arith.constant dense<0xFF800000> : vector<8xf32>
    %72 = vector.multi_reduction <maximumf>, %71, %cst_31 [1] : vector<8x8xf32> to vector<8xf32>
    %73 = vector.shape_cast %72 : vector<8xf32> to vector<8x1xf32>
    %74 = vector.broadcast %73 : vector<8x1xf32> to vector<8x8xf32>
    %75 = arith.subf %71, %74 : vector<8x8xf32>
    %76 = math.exp %75 : vector<8x8xf32>
    %cst_32 = arith.constant dense<0.000000e+00> : vector<8xf32>
    %77 = vector.multi_reduction <add>, %76, %cst_32 [1] : vector<8x8xf32> to vector<8xf32>
    %78 = vector.shape_cast %77 : vector<8xf32> to vector<8x1xf32>
    %cst_33 = arith.constant 9.99999971E-10 : f32
    %79 = vector.broadcast %cst_33 : f32 to vector<8x1xf32>
    %80 = arith.addf %78, %79 : vector<8x1xf32>
    %81 = vector.broadcast %80 : vector<8x1xf32> to vector<8x8xf32>
    %82 = arith.divf %76, %81 : vector<8x8xf32>
    %cst_34 = arith.constant dense<0.000000e+00> : vector<8x8xf32>
    %83 = tpu.matmul %82, %70, %cst_34 {dimension_numbers = #tpu.dot_dimension_numbers<[1], [0], [0], [1], [0, 0, 1, 1], [], []>} : vector<8x8xf32>, vector<8x8xf32>, vector<8x8xf32> -> vector<8x8xf32>
    %c24 = arith.constant 24 : index
    %c0_35 = arith.constant 0 : index
    %84 = vector.load %arg4[%c24, %c0_35] : memref<32x32xf32, #tpu.memory_space<vmem>>, vector<8x32xf32>
    %cst_36 = arith.constant dense<0.000000e+00> : vector<8x32xf32>
    %85 = tpu.matmul %83, %84, %cst_36 {dimension_numbers = #tpu.dot_dimension_numbers<[1], [0], [0], [1], [0, 0, 1, 1], [], []>} : vector<8x8xf32>, vector<8x32xf32>, vector<8x32xf32> -> vector<8x32xf32>
    %86 = arith.addf %67, %85 : vector<8x32xf32>
    %87 = vector.extract_strided_slice %1 {offsets = [0, 0], sizes = [1, 32], strides = [1, 1]} : vector<6x32xf32> to vector<1x32xf32>
    %88 = vector.broadcast %87 : vector<1x32xf32> to vector<8x32xf32>
    %89 = arith.addf %86, %88 : vector<8x32xf32>
    %90 = arith.addf %0, %89 : vector<8x32xf32>
    %91 = vector.extract_strided_slice %1 {offsets = [1, 0], sizes = [1, 32], strides = [1, 1]} : vector<6x32xf32> to vector<1x32xf32>
    %92 = vector.extract_strided_slice %1 {offsets = [2, 0], sizes = [1, 32], strides = [1, 1]} : vector<6x32xf32> to vector<1x32xf32>
    %cst_37 = arith.constant dense<0.000000e+00> : vector<8xf32>
    %93 = vector.multi_reduction <add>, %90, %cst_37 [1] : vector<8x32xf32> to vector<8xf32>
    %94 = vector.shape_cast %93 : vector<8xf32> to vector<8x1xf32>
    %cst_38 = arith.constant 3.200000e+01 : f32
    %95 = vector.broadcast %cst_38 : f32 to vector<8x1xf32>
    %96 = arith.divf %94, %95 : vector<8x1xf32>
    %97 = vector.broadcast %96 : vector<8x1xf32> to vector<8x32xf32>
    %98 = arith.subf %90, %97 : vector<8x32xf32>
    %99 = arith.mulf %98, %98 : vector<8x32xf32>
    %cst_39 = arith.constant dense<0.000000e+00> : vector<8xf32>
    %100 = vector.multi_reduction <add>, %99, %cst_39 [1] : vector<8x32xf32> to vector<8xf32>
    %101 = vector.shape_cast %100 : vector<8xf32> to vector<8x1xf32>
    %cst_40 = arith.constant 3.200000e+01 : f32
    %102 = vector.broadcast %cst_40 : f32 to vector<8x1xf32>
    %103 = arith.divf %101, %102 : vector<8x1xf32>
    %104 = vector.broadcast %96 : vector<8x1xf32> to vector<8x32xf32>
    %105 = arith.subf %90, %104 : vector<8x32xf32>
    %cst_41 = arith.constant 9.99999974E-6 : f32
    %106 = vector.broadcast %cst_41 : f32 to vector<8x1xf32>
    %107 = arith.addf %103, %106 : vector<8x1xf32>
    %108 = math.rsqrt %107 : vector<8x1xf32>
    %109 = vector.broadcast %108 : vector<8x1xf32> to vector<8x32xf32>
    %110 = arith.mulf %105, %109 : vector<8x32xf32>
    %111 = vector.broadcast %91 : vector<1x32xf32> to vector<8x32xf32>
    %112 = arith.mulf %110, %111 : vector<8x32xf32>
    %113 = vector.broadcast %92 : vector<1x32xf32> to vector<8x32xf32>
    %114 = arith.addf %112, %113 : vector<8x32xf32>
    %c0_42 = arith.constant 0 : index
    %c0_43 = arith.constant 0 : index
    %115 = vector.load %arg5[%c0_42, %c0_43] : memref<32x64xf32, #tpu.memory_space<vmem>>, vector<32x64xf32>
    %cst_44 = arith.constant dense<0.000000e+00> : vector<8x64xf32>
    %116 = tpu.matmul %114, %115, %cst_44 {dimension_numbers = #tpu.dot_dimension_numbers<[1], [0], [0], [1], [0, 0, 1, 1], [], []>} : vector<8x32xf32>, vector<32x64xf32>, vector<8x64xf32> -> vector<8x64xf32>
    %c0_45 = arith.constant 0 : index
    %c0_46 = arith.constant 0 : index
    %117 = vector.load %arg6[%c0_45, %c0_46] : memref<1x64xf32, #tpu.memory_space<vmem>>, vector<1x64xf32>
    %118 = vector.broadcast %117 : vector<1x64xf32> to vector<8x64xf32>
    %119 = arith.addf %116, %118 : vector<8x64xf32>
    %cst_47 = arith.constant 0.000000e+00 : f32
    %120 = vector.broadcast %cst_47 : f32 to vector<8x64xf32>
    %121 = arith.maximumf %119, %120 : vector<8x64xf32>
    %c0_48 = arith.constant 0 : index
    %c0_49 = arith.constant 0 : index
    %122 = vector.load %arg7[%c0_48, %c0_49] : memref<64x32xf32, #tpu.memory_space<vmem>>, vector<64x32xf32>
    %cst_50 = arith.constant dense<0.000000e+00> : vector<8x32xf32>
    %123 = tpu.matmul %121, %122, %cst_50 {dimension_numbers = #tpu.dot_dimension_numbers<[1], [0], [0], [1], [0, 0, 1, 1], [], []>} : vector<8x64xf32>, vector<64x32xf32>, vector<8x32xf32> -> vector<8x32xf32>
    %124 = vector.extract_strided_slice %1 {offsets = [5, 0], sizes = [1, 32], strides = [1, 1]} : vector<6x32xf32> to vector<1x32xf32>
    %125 = vector.broadcast %124 : vector<1x32xf32> to vector<8x32xf32>
    %126 = arith.addf %123, %125 : vector<8x32xf32>
    %127 = arith.addf %114, %126 : vector<8x32xf32>
    %128 = vector.extract_strided_slice %1 {offsets = [3, 0], sizes = [1, 32], strides = [1, 1]} : vector<6x32xf32> to vector<1x32xf32>
    %129 = vector.extract_strided_slice %1 {offsets = [4, 0], sizes = [1, 32], strides = [1, 1]} : vector<6x32xf32> to vector<1x32xf32>
    %cst_51 = arith.constant dense<0.000000e+00> : vector<8xf32>
    %130 = vector.multi_reduction <add>, %127, %cst_51 [1] : vector<8x32xf32> to vector<8xf32>
    %131 = vector.shape_cast %130 : vector<8xf32> to vector<8x1xf32>
    %cst_52 = arith.constant 3.200000e+01 : f32
    %132 = vector.broadcast %cst_52 : f32 to vector<8x1xf32>
    %133 = arith.divf %131, %132 : vector<8x1xf32>
    %134 = vector.broadcast %133 : vector<8x1xf32> to vector<8x32xf32>
    %135 = arith.subf %127, %134 : vector<8x32xf32>
    %136 = arith.mulf %135, %135 : vector<8x32xf32>
    %cst_53 = arith.constant dense<0.000000e+00> : vector<8xf32>
    %137 = vector.multi_reduction <add>, %136, %cst_53 [1] : vector<8x32xf32> to vector<8xf32>
    %138 = vector.shape_cast %137 : vector<8xf32> to vector<8x1xf32>
    %cst_54 = arith.constant 3.200000e+01 : f32
    %139 = vector.broadcast %cst_54 : f32 to vector<8x1xf32>
    %140 = arith.divf %138, %139 : vector<8x1xf32>
    %141 = vector.broadcast %133 : vector<8x1xf32> to vector<8x32xf32>
    %142 = arith.subf %127, %141 : vector<8x32xf32>
    %cst_55 = arith.constant 9.99999974E-6 : f32
    %143 = vector.broadcast %cst_55 : f32 to vector<8x1xf32>
    %144 = arith.addf %140, %143 : vector<8x1xf32>
    %145 = math.rsqrt %144 : vector<8x1xf32>
    %146 = vector.broadcast %145 : vector<8x1xf32> to vector<8x32xf32>
    %147 = arith.mulf %142, %146 : vector<8x32xf32>
    %148 = vector.broadcast %128 : vector<1x32xf32> to vector<8x32xf32>
    %149 = arith.mulf %147, %148 : vector<8x32xf32>
    %150 = vector.broadcast %129 : vector<1x32xf32> to vector<8x32xf32>
    %151 = arith.addf %149, %150 : vector<8x32xf32>
    %c0_56 = arith.constant 0 : index
    %c0_57 = arith.constant 0 : index
    %152 = vector.load %arg9[%c0_56, %c0_57] : memref<8x32xf32, #tpu.memory_space<vmem>>, vector<8x32xf32>
    tpu.vector_store %arg9[%c0_56, %c0_57], %151 {strides = array<i32>} : memref<8x32xf32, #tpu.memory_space<vmem>>, vector<8x32xf32>,
    return
  }
  func.func @transform_0(%arg0: i32) -> (i32, i32) {
    %c0_i32 = arith.constant 0 : i32
    %c0_i32_0 = arith.constant 0 : i32
    return %arg0, %c0_i32 : i32, i32
  }
  func.func @transform_1(%arg0: i32) -> (i32, i32) {
    %c0_i32 = arith.constant 0 : i32
    %c0_i32_0 = arith.constant 0 : i32
    %c0_i32_1 = arith.constant 0 : i32
    return %c0_i32, %c0_i32_0 : i32, i32
  }
  func.func @transform_2(%arg0: i32) -> (i32, i32) {
    %c0_i32 = arith.constant 0 : i32
    %c0_i32_0 = arith.constant 0 : i32
    %c0_i32_1 = arith.constant 0 : i32
    return %c0_i32, %c0_i32_0 : i32, i32
  }
  func.func @transform_3(%arg0: i32) -> (i32, i32) {
    %c0_i32 = arith.constant 0 : i32
    %c0_i32_0 = arith.constant 0 : i32
    %c0_i32_1 = arith.constant 0 : i32
    return %c0_i32, %c0_i32_0 : i32, i32
  }
  func.func @transform_4(%arg0: i32) -> (i32, i32) {
    %c0_i32 = arith.constant 0 : i32
    %c0_i32_0 = arith.constant 0 : i32
    %c0_i32_1 = arith.constant 0 : i32
    return %c0_i32, %c0_i32_0 : i32, i32
  }
  func.func @transform_5(%arg0: i32) -> (i32, i32) {
    %c0_i32 = arith.constant 0 : i32
    %c0_i32_0 = arith.constant 0 : i32
    %c0_i32_1 = arith.constant 0 : i32
    return %c0_i32, %c0_i32_0 : i32, i32
  }
  func.func @transform_6(%arg0: i32) -> (i32, i32) {
    %c0_i32 = arith.constant 0 : i32
    %c0_i32_0 = arith.constant 0 : i32
    %c0_i32_1 = arith.constant 0 : i32
    return %c0_i32, %c0_i32_0 : i32, i32
  }
  func.func @transform_7(%arg0: i32) -> (i32, i32) {
    %c0_i32 = arith.constant 0 : i32
    %c0_i32_0 = arith.constant 0 : i32
    %c0_i32_1 = arith.constant 0 : i32
    return %c0_i32, %c0_i32_0 : i32, i32
  }
  func.func @transform_8(%arg0: i32) -> (i32, i32) {
    %c0_i32 = arith.constant 0 : i32
    %c0_i32_0 = arith.constant 0 : i32
    return %arg0, %c0_i32 : i32, i32
  }
}

</mosaic_0001>

<llo_original>
// kernel: encoder_layer.1
$region0: #{encoder_layer.1}
  #allocation0 [shape = 'u32[]', space=smem, size = 0x4, offset = 0x4, fixed_abs, tag = 'smem constant byte address 0x4 - core index']
  #allocation1 [shape = 'u32[72,128]{1,0:T(1,128)}', space=vmem, size = 0x9000, scoped, tag = 'internal scratch']
  %s0 = inlined_call_operand.vmem [shape: f32[16,32], index: 0, kind: input, shape index: {}]
  %s1 = inlined_call_operand.vmem [shape: f32[32,96], index: 1, kind: input, shape index: {}]
  %s2 = inlined_call_operand.vmem [shape: f32[1,96], index: 2, kind: input, shape index: {}]
  %s3 = inlined_call_operand.vmem [shape: f32[32,32], index: 3, kind: input, shape index: {}]
  %s4 = inlined_call_operand.vmem [shape: f32[32,64], index: 4, kind: input, shape index: {}]
  %s5 = inlined_call_operand.vmem [shape: f32[1,64], index: 5, kind: input, shape index: {}]
  %s6 = inlined_call_operand.vmem [shape: f32[64,32], index: 6, kind: input, shape index: {}]
  %s7 = inlined_call_operand.vmem [shape: f32[6,32], index: 7, kind: input, shape index: {}]
  %s8 = inlined_call_operand.hbm [shape: f32[16,32], index: 8, kind: output, shape index: {}]
  %s9 = sld [smem:[#allocation0]]
  $region65: #{encoder_layer.1} parent=0
    _
  %s11 = ssub.s32 1, %s9
  %s12 = scalar_select 0, %s11, %s9
  $region1: #{encoder_layer.1} parent=0
    #allocation2 [shape = 'u8[8192]{0}', space=vmem, size = 0x2000, scoped, tag = 'output window, operand 0']
    #allocation3 [shape = 's32[2]{0}', space=sflag, size = 0x8, scoped, tag = 'scoped memory for encoder_layer.1']
    %13 = vsyncpa [#allocation3], 0
    %s14 = scalar_lea.sflag [#allocation3], 1
    %15 = vsyncpa %s14, 0
    loop: start=0, step=1, limit=4
    $region2: #{encoder_layer.1} parent=1 // loop_pre_header
      _
    $region3: #{encoder_layer.1} parent=1 // loop_header
      %s17 = sphi 0, %s21
      %p18 = scmp.ge.s32.totalorder %s17, 4
      %s27 = sphi 0, %s29
      %s30 = sphi 0, %s27
      %s31 = sphi 0, %s30
      %s47 = sphi 0, %s31
      %s51 = sphi 0, %s51
      %s53 = sphi 0, %s51
      %s54 = sphi 0, %s53
      %s68 = sphi 0, %s54
      %s72 = sphi 0, %s72
      %s74 = sphi 0, %s72
      %s75 = sphi 0, %s74
      %s89 = sphi 0, %s75
      %s93 = sphi 0, %s93
      %s95 = sphi 0, %s93
      %s96 = sphi 0, %s95
      %s110 = sphi 0, %s96
      %s114 = sphi 0, %s114
      %s116 = sphi 0, %s114
      %s117 = sphi 0, %s116
      %s131 = sphi 0, %s117
      %s135 = sphi 0, %s135
      %s137 = sphi 0, %s135
      %s138 = sphi 0, %s137
      %s152 = sphi 0, %s138
      %s156 = sphi 0, %s156
      %s158 = sphi 0, %s156
      %s159 = sphi 0, %s158
      %s173 = sphi 0, %s159
      %s177 = sphi 0, %s177
      %s179 = sphi 0, %s177
      %s180 = sphi 0, %s179
      %s194 = sphi 0, %s180
      %s200 = sphi 0, %s202
      %s203 = sphi 0, %s200
      %s204 = sphi 0, %s203
      %s220 = sphi 0, %s204
    $region4: #{encoder_layer.1} parent=1 // loop_header_branch
      %20 = sbr.rel (%p18) target = $region8
    $region5: #{encoder_layer.1} parent=1 // loop_body
      %s22 = ssub.s32 %s17, 1
      %s23 = ssub.s32 %s17, 2
      %s24 = sadd.s32 %s17, 1
      %s25 = ssub.s32 %s17, %s24
      %p26 = scmp.eq.s32.totalorder %s25, 0
      %s28 = sadd.s32 %s27, 1
      %s29 = scalar_select %p26, %s27, %s28
      %p32 = pneg %p26
      %p33 = scmp.eq.s32.totalorder %s17, 1
      %p34 = por %p32, %p33
      %p35 = scmp.ne.s32.totalorder %s27, %s30
      %p36 = scmp.eq.s32.totalorder %s17, 0
      %p37 = por %p35, %p36
      %p38 = scmp.ne.s32.totalorder %s27, %s30
      %p39 = scmp.eq.s32.totalorder %s22, 1
      %p40 = por %p38, %p39
      %p41 = scmp.ne.s32.totalorder %s30, %s31
      %p42 = scmp.eq.s32.totalorder %s22, 0
      %p43 = por %p41, %p42
      %p44 = scmp.ne.s32.totalorder %s30, %s31
      %p45 = scmp.eq.s32.totalorder %s23, 1
      %p46 = por %p44, %p45
      %p48 = scmp.ne.s32.totalorder %s31, %s47
      %p49 = scmp.eq.s32.totalorder %s23, 0
      %p50 = por %p48, %p49
      %s52 = sadd.s32 %s51, 1
      %p55 = scmp.eq.s32.totalorder %s17, 1
      %p56 = scmp.ne.s32.totalorder %s51, %s53
      %p57 = scmp.eq.s32.totalorder %s17, 0
      %p58 = por %p56, %p57
      %p59 = scmp.ne.s32.totalorder %s51, %s53
      %p60 = scmp.eq.s32.totalorder %s22, 1
      %p61 = por %p59, %p60
      %p62 = scmp.ne.s32.totalorder %s53, %s54
      %p63 = scmp.eq.s32.totalorder %s22, 0
      %p64 = por %p62, %p63
      %p65 = scmp.ne.s32.totalorder %s53, %s54
      %p66 = scmp.eq.s32.totalorder %s23, 1
      %p67 = por %p65, %p66
      %p69 = scmp.ne.s32.totalorder %s54, %s68
      %p70 = scmp.eq.s32.totalorder %s23, 0
      %p71 = por %p69, %p70
      %s73 = sadd.s32 %s72, 1
      %p76 = scmp.eq.s32.totalorder %s17, 1
      %p77 = scmp.ne.s32.totalorder %s72, %s74
      %p78 = scmp.eq.s32.totalorder %s17, 0
      %p79 = por %p77, %p78
      %p80 = scmp.ne.s32.totalorder %s72, %s74
      %p81 = scmp.eq.s32.totalorder %s22, 1
      %p82 = por %p80, %p81
      %p83 = scmp.ne.s32.totalorder %s74, %s75
      %p84 = scmp.eq.s32.totalorder %s22, 0
      %p85 = por %p83, %p84
      %p86 = scmp.ne.s32.totalorder %s74, %s75
      %p87 = scmp.eq.s32.totalorder %s23, 1
      %p88 = por %p86, %p87
      %p90 = scmp.ne.s32.totalorder %s75, %s89
      %p91 = scmp.eq.s32.totalorder %s23, 0
      %p92 = por %p90, %p91
      %s94 = sadd.s32 %s93, 1
      %p97 = scmp.eq.s32.totalorder %s17, 1
      %p98 = scmp.ne.s32.totalorder %s93, %s95
      %p99 = scmp.eq.s32.totalorder %s17, 0
      %p100 = por %p98, %p99
      %p101 = scmp.ne.s32.totalorder %s93, %s95
      %p102 = scmp.eq.s32.totalorder %s22, 1
      %p103 = por %p101, %p102
      %p104 = scmp.ne.s32.totalorder %s95, %s96
      %p105 = scmp.eq.s32.totalorder %s22, 0
      %p106 = por %p104, %p105
      %p107 = scmp.ne.s32.totalorder %s95, %s96
      %p108 = scmp.eq.s32.totalorder %s23, 1
      %p109 = por %p107, %p108
      %p111 = scmp.ne.s32.totalorder %s96, %s110
      %p112 = scmp.eq.s32.totalorder %s23, 0
      %p113 = por %p111, %p112
      %s115 = sadd.s32 %s114, 1
      %p118 = scmp.eq.s32.totalorder %s17, 1
      %p119 = scmp.ne.s32.totalorder %s114, %s116
      %p120 = scmp.eq.s32.totalorder %s17, 0
      %p121 = por %p119, %p120
      %p122 = scmp.ne.s32.totalorder %s114, %s116
      %p123 = scmp.eq.s32.totalorder %s22, 1
      %p124 = por %p122, %p123
      %p125 = scmp.ne.s32.totalorder %s116, %s117
      %p126 = scmp.eq.s32.totalorder %s22, 0
      %p127 = por %p125, %p126
      %p128 = scmp.ne.s32.totalorder %s116, %s117
      %p129 = scmp.eq.s32.totalorder %s23, 1
      %p130 = por %p128, %p129
      %p132 = scmp.ne.s32.totalorder %s117, %s131
      %p133 = scmp.eq.s32.totalorder %s23, 0
      %p134 = por %p132, %p133
      %s136 = sadd.s32 %s135, 1
      %p139 = scmp.eq.s32.totalorder %s17, 1
      %p140 = scmp.ne.s32.totalorder %s135, %s137
      %p141 = scmp.eq.s32.totalorder %s17, 0
      %p142 = por %p140, %p141
      %p143 = scmp.ne.s32.totalorder %s135, %s137
      %p144 = scmp.eq.s32.totalorder %s22, 1
      %p145 = por %p143, %p144
      %p146 = scmp.ne.s32.totalorder %s137, %s138
      %p147 = scmp.eq.s32.totalorder %s22, 0
      %p148 = por %p146, %p147
      %p149 = scmp.ne.s32.totalorder %s137, %s138
      %p150 = scmp.eq.s32.totalorder %s23, 1
      %p151 = por %p149, %p150
      %p153 = scmp.ne.s32.totalorder %s138, %s152
      %p154 = scmp.eq.s32.totalorder %s23, 0
      %p155 = por %p153, %p154
      %s157 = sadd.s32 %s156, 1
      %p160 = scmp.eq.s32.totalorder %s17, 1
      %p161 = scmp.ne.s32.totalorder %s156, %s158
      %p162 = scmp.eq.s32.totalorder %s17, 0
      %p163 = por %p161, %p162
      %p164 = scmp.ne.s32.totalorder %s156, %s158
      %p165 = scmp.eq.s32.totalorder %s22, 1
      %p166 = por %p164, %p165
      %p167 = scmp.ne.s32.totalorder %s158, %s159
      %p168 = scmp.eq.s32.totalorder %s22, 0
      %p169 = por %p167, %p168
      %p170 = scmp.ne.s32.totalorder %s158, %s159
      %p171 = scmp.eq.s32.totalorder %s23, 1
      %p172 = por %p170, %p171
      %p174 = scmp.ne.s32.totalorder %s159, %s173
      %p175 = scmp.eq.s32.totalorder %s23, 0
      %p176 = por %p174, %p175
      %s178 = sadd.s32 %s177, 1
      %p181 = scmp.eq.s32.totalorder %s17, 1
      %p182 = scmp.ne.s32.totalorder %s177, %s179
      %p183 = scmp.eq.s32.totalorder %s17, 0
      %p184 = por %p182, %p183
      %p185 = scmp.ne.s32.totalorder %s177, %s179
      %p186 = scmp.eq.s32.totalorder %s22, 1
      %p187 = por %p185, %p186
      %p188 = scmp.ne.s32.totalorder %s179, %s180
      %p189 = scmp.eq.s32.totalorder %s22, 0
      %p190 = por %p188, %p189
      %p191 = scmp.ne.s32.totalorder %s179, %s180
      %p192 = scmp.eq.s32.totalorder %s23, 1
      %p193 = por %p191, %p192
      %p195 = scmp.ne.s32.totalorder %s180, %s194
      %p196 = scmp.eq.s32.totalorder %s23, 0
      %p197 = por %p195, %p196
      %s198 = ssub.s32 %s17, %s24
      %p199 = scmp.eq.s32.totalorder %s198, 0
      %s201 = sadd.s32 %s200, 1
      %s202 = scalar_select %p199, %s200, %s201
      %p205 = pneg %p199
      %p206 = scmp.eq.s32.totalorder %s17, 1
      %p207 = por %p205, %p206
      %p208 = scmp.ne.s32.totalorder %s200, %s203
      %p209 = scmp.eq.s32.totalorder %s17, 0
      %p210 = por %p208, %p209
      %p211 = scmp.ne.s32.totalorder %s200, %s203
      %p212 = scmp.eq.s32.totalorder %s22, 1
      %p213 = por %p211, %p212
      %p214 = scmp.ne.s32.totalorder %s203, %s204
      %p215 = scmp.eq.s32.totalorder %s22, 0
      %p216 = por %p214, %p215
      %p217 = scmp.ne.s32.totalorder %s203, %s204
      %p218 = scmp.eq.s32.totalorder %s23, 1
      %p219 = por %p217, %p218
      %p221 = scmp.ne.s32.totalorder %s204, %s220
      %p222 = scmp.eq.s32.totalorder %s23, 0
      %p223 = por %p221, %p222
      %p224 = scmp.le.s32.totalorder 1, %s17
      %p225 = scmp.lt.s32.totalorder %s17, 3
      %p226 = pnand %p224, %p225
      %p227 = pneg %p226
      // Predicated region
      $region9: #{encoder_layer.1} parent=5 // pred_check
        _
      $region10: #{encoder_layer.1} parent=5 // pred_check_branch
        %229 = sbr.rel (%p226) target = $region12
      $region11: #{encoder_layer.1} parent=5 // pred_region
        %s230 = ssub.s32 %s17, 1
        // Predicated region
        $region13: #{encoder_layer.1} parent=11 // pred_check
          %p231 = pneg %p64
        $region14: #{encoder_layer.1} parent=11 // pred_check_branch
          %233 = sbr.rel (%p231) target = $region16
        $region15: #{encoder_layer.1} parent=11 // pred_region
          _
        $region16: #{encoder_layer.1} parent=11 // pred_fallthru
          _
        // Predicated region
        $region17: #{encoder_layer.1} parent=11 // pred_check
          %p234 = pneg %p85
        $region18: #{encoder_layer.1} parent=11 // pred_check_branch
          %236 = sbr.rel (%p234) target = $region20
        $region19: #{encoder_layer.1} parent=11 // pred_region
          _
        $region20: #{encoder_layer.1} parent=11 // pred_fallthru
          _
        // Predicated region
        $region21: #{encoder_layer.1} parent=11 // pred_check
          %p237 = pneg %p106
        $region22: #{encoder_layer.1} parent=11 // pred_check_branch
          %239 = sbr.rel (%p237) target = $region24
        $region23: #{encoder_layer.1} parent=11 // pred_region
          _
        $region24: #{encoder_layer.1} parent=11 // pred_fallthru
          _
        // Predicated region
        $region25: #{encoder_layer.1} parent=11 // pred_check
          %p240 = pneg %p127
        $region26: #{encoder_layer.1} parent=11 // pred_check_branch
          %242 = sbr.rel (%p240) target = $region28
        $region27: #{encoder_layer.1} parent=11 // pred_region
          _
        $region28: #{encoder_layer.1} parent=11 // pred_fallthru
          _
        // Predicated region
        $region29: #{encoder_layer.1} parent=11 // pred_check
          %p243 = pneg %p148
        $region30: #{encoder_layer.1} parent=11 // pred_check_branch
          %245 = sbr.rel (%p243) target = $region32
        $region31: #{encoder_layer.1} parent=11 // pred_region
          _
        $region32: #{encoder_layer.1} parent=11 // pred_fallthru
          _
        // Predicated region
        $region33: #{encoder_layer.1} parent=11 // pred_check
          %p246 = pneg %p169
        $region34: #{encoder_layer.1} parent=11 // pred_check_branch
          %248 = sbr.rel (%p246) target = $region36
        $region35: #{encoder_layer.1} parent=11 // pred_region
          _
        $region36: #{encoder_layer.1} parent=11 // pred_fallthru
          _
        // Predicated region
        $region37: #{encoder_layer.1} parent=11 // pred_check
          %p249 = pneg %p190
        $region38: #{encoder_layer.1} parent=11 // pred_check_branch
          %251 = sbr.rel (%p249) target = $region40
        $region39: #{encoder_layer.1} parent=11 // pred_region
          _
        $region40: #{encoder_layer.1} parent=11 // pred_fallthru
          _
      $region12: #{encoder_layer.1} parent=5 // pred_fallthru
        _
      %p252 = scmp.lt.s32.totalorder %s17, 2
      // Predicated region
      $region41: #{encoder_layer.1} parent=5 // pred_check
        %p253 = pneg %p252
      $region42: #{encoder_layer.1} parent=5 // pred_check_branch
        %255 = sbr.rel (%p253) target = $region44
      $region43: #{encoder_layer.1} parent=5 // pred_region
        // Predicated region
        $region45: #{encoder_layer.1} parent=43 // pred_check
          %p256 = pneg %p37
        $region46: #{encoder_layer.1} parent=43 // pred_check_branch
          %258 = sbr.rel (%p256) target = $region48
        $region47: #{encoder_layer.1} parent=43 // pred_region
          %p259 = scmp.lt.s32.totalorder %s17, 1
          %s260 = scalar_select %p259, %s17, 1
          %s261 = smul.addr %s260, 8
          %s262 = scalar_lea.vmem %s0, %s261
        $region48: #{encoder_layer.1} parent=43 // pred_fallthru
          _
      $region44: #{encoder_layer.1} parent=5 // pred_fallthru
        _
      %p263 = scmp.le.s32.totalorder 1, %s17
      %p264 = scmp.lt.s32.totalorder %s17, 3
      %p265 = pnand %p263, %p264
      %p266 = pneg %p265
      // Predicated region
      $region49: #{encoder_layer.1} parent=5 // pred_check
        _
      $region50: #{encoder_layer.1} parent=5 // pred_check_branch
        %268 = sbr.rel (%p265) target = $region52
      $region51: #{encoder_layer.1} parent=5 // pred_region
        %s269 = ssub.s32 %s17, 1
        %p270 = scmp.lt.s32.totalorder %s22, 1
        %s271 = scalar_select %p270, %s22, 1
        %s272 = smul.addr %s271, 8
        %s273 = scalar_lea.vmem %s0, %s272
        %p274 = pneg %p43
        %p275 = pneg %p40
        %p276 = pneg %p64
        %p277 = pneg %p61
        %p278 = pneg %p85
        %p279 = pneg %p82
        %p280 = pneg %p106
        %p281 = pneg %p103
        %p282 = pneg %p127
        %p283 = pneg %p124
        %p284 = pneg %p148
        %p285 = pneg %p145
        %p286 = pneg %p169
        %p287 = pneg %p166
        %p288 = pneg %p190
        %p289 = pneg %p187
        %p290 = pneg %p216
        %p291 = pneg %p213
        %s292 = sand.u32 %s203, 1
        %s293 = scalar_lea.sflag [#allocation3], %s292
        %s294 = sand.u32 %s203, 1
        %s295 = smul.addr %s294, 8
        %s296 = scalar_lea.vmem [#allocation2], %s295
        %p297 = scmp.lt.s32.totalorder %s22, 1
        %s298 = scalar_select %p297, %s22, 1
        %s299 = smul.addr %s298, 8
        %s300 = scalar_lea.vmem %s0, %s299
        %v301 = vld [vmem:[%s300] sm:$0xff]
        %v302 = vld [vmem:[%s7] sm:$0x3f]
        %v303 = vld [vmem:[%s1] sm:$0xff]
        %v304 = vld [vmem:[%s1 + $0x8] sm:$0xff]
        %v305 = vld [vmem:[%s1 + $0x10] sm:$0xff]
        %v306 = vld [vmem:[%s1 + $0x18] sm:$0xff]
        %v307 = vld [vmem:[%s2] sm:$0x1]
        %v309 = vperm.slane %v307, 0
        %vm311 = vcmask 261120
        %v313 = vsel %vm311, %v301, 0
        %315 = vmatpush.msra.mxu0 0.0
        %316 = vmatpush.msra.mxu0 0.0
        %317 = vmatpush.msra.mxu0 0.0
        %318 = vmatpush.msra.mxu0 0.0
        %319 = vmatpush.msra.mxu0 0.0
        %320 = vmatpush.msra.mxu0 0.0
        %321 = vmatpush.msra.mxu0 0.0
        %322 = vmatpush.msra.mxu0 0.0
        %323 = vmatpush.msra.mxu0 0.0
        %324 = vmatpush.msra.mxu0 0.0
        %325 = vmatpush.msra.mxu0 0.0
        %326 = vmatpush.msra.mxu0 0.0
        %327 = vmatpush.msra.mxu0 %v306
        %328 = vmatpush.msra.mxu0 %v305
        %329 = vmatpush.msra.mxu0 %v304
        %330 = vmatpush.msra.mxu0 %v303
        %331 = vmatmul.f32.gmra.mxu0 %v313
        %v332 = vpop.f32.mrf.mxu0
        %v333 = vadd.f32 %v309, %v332
        %334 = vdwg.mxu0
        %336 = vrot.lane.b32.xlu0 %v333, 96
        %v337 = vpop.permute.xlu0 %336
        %vm338 = vcmask 64512
        %v339 = vsel %vm338, %v333, 0
        %v341 = vsel %vm338, %v337, 0
        %343 = vmatpush.xpose.msra.mxu0 0.0
        %344 = vmatpush.xpose.msra.mxu0 0.0
        %345 = vmatpush.xpose.msra.mxu0 0.0
        %346 = vmatpush.xpose.msra.mxu0 0.0
        %347 = vmatpush.xpose.msra.mxu0 0.0
        %348 = vmatpush.xpose.msra.mxu0 0.0
        %349 = vmatpush.xpose.msra.mxu0 0.0
        %350 = vmatpush.xpose.msra.mxu0 0.0
        %351 = vmatpush.xpose.msra.mxu0 0.0
        %352 = vmatpush.xpose.msra.mxu0 0.0
        %353 = vmatpush.xpose.msra.mxu0 0.0
        %354 = vmatpush.xpose.msra.mxu0 0.0
        %355 = vmatpush.xpose.msra.mxu0 0.0
        %356 = vmatpush.xpose.msra.mxu0 0.0
        %357 = vmatpush.xpose.msra.mxu0 0.0
        %358 = vmatpush.xpose.msra.mxu0 %v341
        %359 = vmatmul.f32.gmra.mxu0 %v339
        %v360 = vpop.f32.mrf.mxu0
        %v361 = vadd.f32 0.0, %v360
        %362 = vdwg.mxu0
        %v363 = vsel %vm338, %v361, -inf
        %364 = vmax.xlane.f32.xlu0 %v363
        %v365 = vpop.xlane.xlu0 %364
        %v366 = vsub.f32 %v361, %v365
        %v367 = vmul.f32 %v366, 1.442695
        %v368 = vpow.pop %v367
        %v369 = vsel %vm338, %v368, 0.0
        %370 = vadd.xlane.f32.xlu0 %v369
        %v371 = vpop.xlane.xlu0 %370
        %v372 = vadd.f32 %v371, 1e-09
        %v373 = vrcp.pop %v372
        %v374 = vmul.f32 %v372, %v373
        %v375 = vsub.f32 1.0, %v374
        %v376 = vmul.f32 %v373, %v375
        %v377 = vadd.f32 %v373, %v376
        %vm378 = vweird.f32 %v372
        %vm379 = vweird.f32 %v373
        %vm380 = vmor %vm378, %vm379
        %v381 = vsel %vm380, %v373, %v377
        %v382 = vand.u32 2147483647, %v372
        %vm383 = vcmp.eq.f32.partialorder %v382, 8.507059e+37
        %v384 = vand.u32 %v372, 2147483648
        %v385 = vor.u32 1.1754944e-38, %v384
        %v386 = vsel %vm383, %v385, %v381
        %v387 = vmul.f32 %v368, %v386
        %388 = vrot.lane.b32.xlu0 %v333, 64
        %v389 = vpop.permute.xlu0 %388
        %v392 = vsel %vm338, %v387, 0
        %394 = vmatpush.msra.mxu0 0.0
        %395 = vmatpush.msra.mxu0 0.0
        %396 = vmatpush.msra.mxu0 0.0
        %397 = vmatpush.msra.mxu0 0.0
        %398 = vmatpush.msra.mxu0 0.0
        %399 = vmatpush.msra.mxu0 0.0
        %400 = vmatpush.msra.mxu0 0.0
        %401 = vmatpush.msra.mxu0 0.0
        %402 = vmatpush.msra.mxu0 0.0
        %403 = vmatpush.msra.mxu0 0.0
        %404 = vmatpush.msra.mxu0 0.0
        %405 = vmatpush.msra.mxu0 0.0
        %406 = vmatpush.msra.mxu0 0.0
        %407 = vmatpush.msra.mxu0 0.0
        %408 = vmatpush.msra.mxu0 0.0
        %409 = vmatpush.msra.mxu0 %v389
        %410 = vmatmul.f32.gmra.mxu0 %v392
        %v411 = vpop.f32.mrf.mxu0
        %v412 = vadd.f32 0.0, %v411
        %413 = vdwg.mxu0
        %v414 = vld [vmem:[%s3] sm:$0xff]
        %415 = vrot.lane.b32.xlu0 %v333, 120
        %v416 = vpop.permute.xlu0 %415
        %417 = vrot.lane.b32.xlu0 %v333, 88
        %v418 = vpop.permute.xlu0 %417
        %v419 = vsel %vm338, %v416, 0
        %v421 = vsel %vm338, %v418, 0
        %423 = vmatpush.xpose.msra.mxu0 0.0
        %424 = vmatpush.xpose.msra.mxu0 0.0
        %425 = vmatpush.xpose.msra.mxu0 0.0
        %426 = vmatpush.xpose.msra.mxu0 0.0
        %427 = vmatpush.xpose.msra.mxu0 0.0
        %428 = vmatpush.xpose.msra.mxu0 0.0
        %429 = vmatpush.xpose.msra.mxu0 0.0
        %430 = vmatpush.xpose.msra.mxu0 0.0
        %431 = vmatpush.xpose.msra.mxu0 0.0
        %432 = vmatpush.xpose.msra.mxu0 0.0
        %433 = vmatpush.xpose.msra.mxu0 0.0
        %434 = vmatpush.xpose.msra.mxu0 0.0
        %435 = vmatpush.xpose.msra.mxu0 0.0
        %436 = vmatpush.xpose.msra.mxu0 0.0
        %437 = vmatpush.xpose.msra.mxu0 0.0
        %438 = vmatpush.xpose.msra.mxu0 %v421
        %439 = vmatmul.f32.gmra.mxu0 %v419
        %v440 = vpop.f32.mrf.mxu0
        %v441 = vadd.f32 0.0, %v440
        %442 = vdwg.mxu0
        %v443 = vsel %vm338, %v441, -inf
        %444 = vmax.xlane.f32.xlu0 %v443
        %v445 = vpop.xlane.xlu0 %444
        %v446 = vsub.f32 %v441, %v445
        %v447 = vmul.f32 %v446, 1.442695
        %v448 = vpow.pop %v447
        %v449 = vsel %vm338, %v448, 0.0
        %450 = vadd.xlane.f32.xlu0 %v449
        %v451 = vpop.xlane.xlu0 %450
        %v452 = vadd.f32 %v451, 1e-09
        %v453 = vrcp.pop %v452
        %v454 = vmul.f32 %v452, %v453
        %v455 = vsub.f32 1.0, %v454
        %v456 = vmul.f32 %v453, %v455
        %v457 = vadd.f32 %v453, %v456
        %vm458 = vweird.f32 %v452
        %vm459 = vweird.f32 %v453
        %vm460 = vmor %vm458, %vm459
        %v461 = vsel %vm460, %v453, %v457
        %v462 = vand.u32 2147483647, %v452
        %vm463 = vcmp.eq.f32.partialorder %v462, 8.507059e+37
        %v464 = vand.u32 %v452, 2147483648
        %v465 = vor.u32 1.1754944e-38, %v464
        %v466 = vsel %vm463, %v465, %v461
        %v467 = vmul.f32 %v448, %v466
        %468 = vrot.lane.b32.xlu0 %v333, 56
        %v469 = vpop.permute.xlu0 %468
        %v472 = vsel %vm338, %v467, 0
        %474 = vmatpush.msra.mxu0 0.0
        %475 = vmatpush.msra.mxu0 0.0
        %476 = vmatpush.msra.mxu0 0.0
        %477 = vmatpush.msra.mxu0 0.0
        %478 = vmatpush.msra.mxu0 0.0
        %479 = vmatpush.msra.mxu0 0.0
        %480 = vmatpush.msra.mxu0 0.0
        %481 = vmatpush.msra.mxu0 0.0
        %482 = vmatpush.msra.mxu0 0.0
        %483 = vmatpush.msra.mxu0 0.0
        %484 = vmatpush.msra.mxu0 0.0
        %485 = vmatpush.msra.mxu0 0.0
        %486 = vmatpush.msra.mxu0 0.0
        %487 = vmatpush.msra.mxu0 0.0
        %488 = vmatpush.msra.mxu0 0.0
        %489 = vmatpush.msra.mxu0 %v469
        %490 = vmatmul.f32.gmra.mxu0 %v472
        %v491 = vpop.f32.mrf.mxu0
        %v492 = vadd.f32 0.0, %v491
        %493 = vdwg.mxu0
        %v494 = vld [vmem:[%s3 + $0x8] sm:$0xff]
        %v496 = vsel %vm338, %v492, 0
        %498 = vmatpush.msra.mxu0 0.0
        %499 = vmatpush.msra.mxu0 0.0
        %500 = vmatpush.msra.mxu0 0.0
        %501 = vmatpush.msra.mxu0 0.0
        %502 = vmatpush.msra.mxu0 0.0
        %503 = vmatpush.msra.mxu0 0.0
        %504 = vmatpush.msra.mxu0 0.0
        %505 = vmatpush.msra.mxu0 0.0
        %506 = vmatpush.msra.mxu0 0.0
        %507 = vmatpush.msra.mxu0 0.0
        %508 = vmatpush.msra.mxu0 0.0
        %509 = vmatpush.msra.mxu0 0.0
        %510 = vmatpush.msra.mxu0 0.0
        %511 = vmatpush.msra.mxu0 0.0
        %512 = vmatpush.msra.mxu0 0.0
        %513 = vmatpush.msra.mxu0 %v494
        %514 = vmatmul.f32.gmra.mxu0 %v496
        %v515 = vpop.f32.mrf.mxu0
        %v516 = vadd.f32 0.0, %v515
        %517 = vdwg.mxu0
        %v519 = vsel %vm338, %v412, 0
        %521 = vmatpush.msra.mxu0 0.0
        %522 = vmatpush.msra.mxu0 0.0
        %523 = vmatpush.msra.mxu0 0.0
        %524 = vmatpush.msra.mxu0 0.0
        %525 = vmatpush.msra.mxu0 0.0
        %526 = vmatpush.msra.mxu0 0.0
        %527 = vmatpush.msra.mxu0 0.0
        %528 = vmatpush.msra.mxu0 0.0
        %529 = vmatpush.msra.mxu0 0.0
        %530 = vmatpush.msra.mxu0 0.0
        %531 = vmatpush.msra.mxu0 0.0
        %532 = vmatpush.msra.mxu0 0.0
        %533 = vmatpush.msra.mxu0 0.0
        %534 = vmatpush.msra.mxu0 0.0
        %535 = vmatpush.msra.mxu0 0.0
        %536 = vmatpush.msra.mxu0 %v414
        %537 = vmatmul.f32.gmra.mxu0 %v519
        %v538 = vpop.f32.mrf.mxu0
        %v539 = vadd.f32 %v516, %v538
        %540 = vdwg.mxu0
        %541 = vrot.lane.b32.xlu0 %v333, 112
        %v542 = vpop.permute.xlu0 %541
        %543 = vrot.lane.b32.xlu0 %v333, 80
        %v544 = vpop.permute.xlu0 %543
        %v545 = vsel %vm338, %v542, 0
        %v547 = vsel %vm338, %v544, 0
        %549 = vmatpush.xpose.msra.mxu0 0.0
        %550 = vmatpush.xpose.msra.mxu0 0.0
        %551 = vmatpush.xpose.msra.mxu0 0.0
        %552 = vmatpush.xpose.msra.mxu0 0.0
        %553 = vmatpush.xpose.msra.mxu0 0.0
        %554 = vmatpush.xpose.msra.mxu0 0.0
        %555 = vmatpush.xpose.msra.mxu0 0.0
        %556 = vmatpush.xpose.msra.mxu0 0.0
        %557 = vmatpush.xpose.msra.mxu0 0.0
        %558 = vmatpush.xpose.msra.mxu0 0.0
        %559 = vmatpush.xpose.msra.mxu0 0.0
        %560 = vmatpush.xpose.msra.mxu0 0.0
        %561 = vmatpush.xpose.msra.mxu0 0.0
        %562 = vmatpush.xpose.msra.mxu0 0.0
        %563 = vmatpush.xpose.msra.mxu0 0.0
        %564 = vmatpush.xpose.msra.mxu0 %v547
        %565 = vmatmul.f32.gmra.mxu0 %v545
        %v566 = vpop.f32.mrf.mxu0
        %v567 = vadd.f32 0.0, %v566
        %568 = vdwg.mxu0
        %v569 = vsel %vm338, %v567, -inf
        %570 = vmax.xlane.f32.xlu0 %v569
        %v571 = vpop.xlane.xlu0 %570
        %v572 = vsub.f32 %v567, %v571
        %v573 = vmul.f32 %v572, 1.442695
        %v574 = vpow.pop %v573
        %v575 = vsel %vm338, %v574, 0.0
        %576 = vadd.xlane.f32.xlu0 %v575
        %v577 = vpop.xlane.xlu0 %576
        %v578 = vadd.f32 %v577, 1e-09
        %v579 = vrcp.pop %v578
        %v580 = vmul.f32 %v578, %v579
        %v581 = vsub.f32 1.0, %v580
        %v582 = vmul.f32 %v579, %v581
        %v583 = vadd.f32 %v579, %v582
        %vm584 = vweird.f32 %v578
        %vm585 = vweird.f32 %v579
        %vm586 = vmor %vm584, %vm585
        %v587 = vsel %vm586, %v579, %v583
        %v588 = vand.u32 2147483647, %v578
        %vm589 = vcmp.eq.f32.partialorder %v588, 8.507059e+37
        %v590 = vand.u32 %v578, 2147483648
        %v591 = vor.u32 1.1754944e-38, %v590
        %v592 = vsel %vm589, %v591, %v587
        %v593 = vmul.f32 %v574, %v592
        %594 = vrot.lane.b32.xlu0 %v333, 48
        %v595 = vpop.permute.xlu0 %594
        %v598 = vsel %vm338, %v593, 0
        %600 = vmatpush.msra.mxu0 0.0
        %601 = vmatpush.msra.mxu0 0.0
        %602 = vmatpush.msra.mxu0 0.0
        %603 = vmatpush.msra.mxu0 0.0
        %604 = vmatpush.msra.mxu0 0.0
        %605 = vmatpush.msra.mxu0 0.0
        %606 = vmatpush.msra.mxu0 0.0
        %607 = vmatpush.msra.mxu0 0.0
        %608 = vmatpush.msra.mxu0 0.0
        %609 = vmatpush.msra.mxu0 0.0
        %610 = vmatpush.msra.mxu0 0.0
        %611 = vmatpush.msra.mxu0 0.0
        %612 = vmatpush.msra.mxu0 0.0
        %613 = vmatpush.msra.mxu0 0.0
        %614 = vmatpush.msra.mxu0 0.0
        %615 = vmatpush.msra.mxu0 %v595
        %616 = vmatmul.f32.gmra.mxu0 %v598
        %v617 = vpop.f32.mrf.mxu0
        %v618 = vadd.f32 0.0, %v617
        %619 = vdwg.mxu0
        %v620 = vld [vmem:[%s3 + $0x10] sm:$0xff]
        %v622 = vsel %vm338, %v618, 0
        %624 = vmatpush.msra.mxu0 0.0
        %625 = vmatpush.msra.mxu0 0.0
        %626 = vmatpush.msra.mxu0 0.0
        %627 = vmatpush.msra.mxu0 0.0
        %628 = vmatpush.msra.mxu0 0.0
        %629 = vmatpush.msra.mxu0 0.0
        %630 = vmatpush.msra.mxu0 0.0
        %631 = vmatpush.msra.mxu0 0.0
        %632 = vmatpush.msra.mxu0 0.0
        %633 = vmatpush.msra.mxu0 0.0
        %634 = vmatpush.msra.mxu0 0.0
        %635 = vmatpush.msra.mxu0 0.0
        %636 = vmatpush.msra.mxu0 0.0
        %637 = vmatpush.msra.mxu0 0.0
        %638 = vmatpush.msra.mxu0 0.0
        %639 = vmatpush.msra.mxu0 %v620
        %640 = vmatmul.f32.gmra.mxu0 %v622
        %v641 = vpop.f32.mrf.mxu0
        %v642 = vadd.f32 0.0, %v641
        %643 = vdwg.mxu0
        %v644 = vadd.f32 %v539, %v642
        %645 = vrot.lane.b32.xlu0 %v333, 104
        %v646 = vpop.permute.xlu0 %645
        %647 = vrot.lane.b32.xlu0 %v333, 72
        %v648 = vpop.permute.xlu0 %647
        %v649 = vsel %vm338, %v646, 0
        %v651 = vsel %vm338, %v648, 0
        %653 = vmatpush.xpose.msra.mxu0 0.0
        %654 = vmatpush.xpose.msra.mxu0 0.0
        %655 = vmatpush.xpose.msra.mxu0 0.0
        %656 = vmatpush.xpose.msra.mxu0 0.0
        %657 = vmatpush.xpose.msra.mxu0 0.0
        %658 = vmatpush.xpose.msra.mxu0 0.0
        %659 = vmatpush.xpose.msra.mxu0 0.0
        %660 = vmatpush.xpose.msra.mxu0 0.0
        %661 = vmatpush.xpose.msra.mxu0 0.0
        %662 = vmatpush.xpose.msra.mxu0 0.0
        %663 = vmatpush.xpose.msra.mxu0 0.0
        %664 = vmatpush.xpose.msra.mxu0 0.0
        %665 = vmatpush.xpose.msra.mxu0 0.0
        %666 = vmatpush.xpose.msra.mxu0 0.0
        %667 = vmatpush.xpose.msra.mxu0 0.0
        %668 = vmatpush.xpose.msra.mxu0 %v651
        %669 = vmatmul.f32.gmra.mxu0 %v649
        %v670 = vpop.f32.mrf.mxu0
        %v671 = vadd.f32 0.0, %v670
        %672 = vdwg.mxu0
        %v673 = vsel %vm338, %v671, -inf
        %674 = vmax.xlane.f32.xlu0 %v673
        %v675 = vpop.xlane.xlu0 %674
        %v676 = vsub.f32 %v671, %v675
        %v677 = vmul.f32 %v676, 1.442695
        %v678 = vpow.pop %v677
        %v679 = vsel %vm338, %v678, 0.0
        %680 = vadd.xlane.f32.xlu0 %v679
        %v681 = vpop.xlane.xlu0 %680
        %v682 = vadd.f32 %v681, 1e-09
        %v683 = vrcp.pop %v682
        %v684 = vmul.f32 %v682, %v683
        %v685 = vsub.f32 1.0, %v684
        %v686 = vmul.f32 %v683, %v685
        %v687 = vadd.f32 %v683, %v686
        %vm688 = vweird.f32 %v682
        %vm689 = vweird.f32 %v683
        %vm690 = vmor %vm688, %vm689
        %v691 = vsel %vm690, %v683, %v687
        %v692 = vand.u32 2147483647, %v682
        %vm693 = vcmp.eq.f32.partialorder %v692, 8.507059e+37
        %v694 = vand.u32 %v682, 2147483648
        %v695 = vor.u32 1.1754944e-38, %v694
        %v696 = vsel %vm693, %v695, %v691
        %v697 = vmul.f32 %v678, %v696
        %698 = vrot.lane.b32.xlu0 %v333, 40
        %v699 = vpop.permute.xlu0 %698
        %v702 = vsel %vm338, %v697, 0
        %704 = vmatpush.msra.mxu0 0.0
        %705 = vmatpush.msra.mxu0 0.0
        %706 = vmatpush.msra.mxu0 0.0
        %707 = vmatpush.msra.mxu0 0.0
        %708 = vmatpush.msra.mxu0 0.0
        %709 = vmatpush.msra.mxu0 0.0
        %710 = vmatpush.msra.mxu0 0.0
        %711 = vmatpush.msra.mxu0 0.0
        %712 = vmatpush.msra.mxu0 0.0
        %713 = vmatpush.msra.mxu0 0.0
        %714 = vmatpush.msra.mxu0 0.0
        %715 = vmatpush.msra.mxu0 0.0
        %716 = vmatpush.msra.mxu0 0.0
        %717 = vmatpush.msra.mxu0 0.0
        %718 = vmatpush.msra.mxu0 0.0
        %719 = vmatpush.msra.mxu0 %v699
        %720 = vmatmul.f32.gmra.mxu0 %v702
        %v721 = vpop.f32.mrf.mxu0
        %v722 = vadd.f32 0.0, %v721
        %723 = vdwg.mxu0
        %v724 = vld [vmem:[%s3 + $0x18] sm:$0xff]
        %v726 = vsel %vm338, %v722, 0
        %728 = vmatpush.msra.mxu0 0.0
        %729 = vmatpush.msra.mxu0 0.0
        %730 = vmatpush.msra.mxu0 0.0
        %731 = vmatpush.msra.mxu0 0.0
        %732 = vmatpush.msra.mxu0 0.0
        %733 = vmatpush.msra.mxu0 0.0
        %734 = vmatpush.msra.mxu0 0.0
        %735 = vmatpush.msra.mxu0 0.0
        %736 = vmatpush.msra.mxu0 0.0
        %737 = vmatpush.msra.mxu0 0.0
        %738 = vmatpush.msra.mxu0 0.0
        %739 = vmatpush.msra.mxu0 0.0
        %740 = vmatpush.msra.mxu0 0.0
        %741 = vmatpush.msra.mxu0 0.0
        %742 = vmatpush.msra.mxu0 0.0
        %743 = vmatpush.msra.mxu0 %v724
        %744 = vmatmul.f32.gmra.mxu0 %v726
        %v745 = vpop.f32.mrf.mxu0
        %v746 = vadd.f32 0.0, %v745
        %747 = vdwg.mxu0
        %v748 = vadd.f32 %v644, %v746
        %v749 = vperm.slane %v302, 0
        %v750 = vadd.f32 %v748, %v749
        %v751 = vadd.f32 %v301, %v750
        %v752 = vsel %vm311, %v751, 0.0
        %753 = vadd.xlane.f32.xlu0 %v752
        %v754 = vpop.xlane.xlu0 %753
        %v755 = vrcp.pop 32.0
        %v756 = vmul.f32 32.0, %v755
        %v757 = vsub.f32 1.0, %v756
        %v758 = vmul.f32 %v755, %v757
        %v759 = vadd.f32 %v755, %v758
        %vm760 = vweird.f32 %v755
        %v761 = vsel %vm760, %v755, %v759
        %v762 = vmul.f32 %v754, %v761
        %v763 = vsub.f32 %v751, %v762
        %v764 = vmul.f32 %v763, %v763
        %v765 = vsel %vm311, %v764, 0.0
        %766 = vadd.xlane.f32.xlu0 %v765
        %v767 = vpop.xlane.xlu0 %766
        %v768 = vmul.f32 %v767, %v761
        %v769 = vadd.f32 %v768, 1e-05
        %v770 = vrsqrt.pop %v769
        %v771 = vmul.f32 %v770, %v769
        %v772 = vmul.f32 %v771, %v770
        %v773 = vmul.f32 0.5, %v772
        %v774 = vsub.f32 1.5, %v773
        %v775 = vmul.f32 %v770, %v774
        %vm776 = vweird.f32 %v769
        %vm777 = vweird.f32 %v770
        %vm778 = vmor %vm776, %vm777
        %v779 = vsel %vm778, %v770, %v775
        %v780 = vmul.f32 %v763, %v779
        %v781 = vperm.slane %v302, 1
        %v782 = vmul.f32 %v780, %v781
        %v783 = vperm.slane %v302, 2
        %v784 = vadd.f32 %v782, %v783
        %v785 = vld [vmem:[%s4] sm:$0xff]
        %v786 = vld [vmem:[%s4 + $0x8] sm:$0xff]
        %v787 = vld [vmem:[%s4 + $0x10] sm:$0xff]
        %v788 = vld [vmem:[%s4 + $0x18] sm:$0xff]
        %v789 = vld [vmem:[%s5] sm:$0x1]
        %v791 = vperm.slane %v789, 0
        %v794 = vsel %vm311, %v784, 0
        %796 = vmatpush.msra.mxu0 0.0
        %797 = vmatpush.msra.mxu0 0.0
        %798 = vmatpush.msra.mxu0 0.0
        %799 = vmatpush.msra.mxu0 0.0
        %800 = vmatpush.msra.mxu0 0.0
        %801 = vmatpush.msra.mxu0 0.0
        %802 = vmatpush.msra.mxu0 0.0
        %803 = vmatpush.msra.mxu0 0.0
        %804 = vmatpush.msra.mxu0 0.0
        %805 = vmatpush.msra.mxu0 0.0
        %806 = vmatpush.msra.mxu0 0.0
        %807 = vmatpush.msra.mxu0 0.0
        %808 = vmatpush.msra.mxu0 %v788
        %809 = vmatpush.msra.mxu0 %v787
        %810 = vmatpush.msra.mxu0 %v786
        %811 = vmatpush.msra.mxu0 %v785
        %812 = vmatmul.f32.gmra.mxu0 %v794
        %v813 = vpop.f32.mrf.mxu0
        %v814 = vadd.f32 %v791, %v813
        %815 = vdwg.mxu0
        %v816 = vmax.f32 %v814, 0.0
        %v817 = vld [vmem:[%s6] sm:$0xff]
        %v818 = vld [vmem:[%s6 + $0x8] sm:$0xff]
        %v819 = vld [vmem:[%s6 + $0x10] sm:$0xff]
        %v820 = vld [vmem:[%s6 + $0x18] sm:$0xff]
        %v821 = vld [vmem:[%s6 + $0x20] sm:$0xff]
        %v822 = vld [vmem:[%s6 + $0x28] sm:$0xff]
        %v823 = vld [vmem:[%s6 + $0x30] sm:$0xff]
        %v824 = vld [vmem:[%s6 + $0x38] sm:$0xff]
        %v825 = vperm.slane %v302, 5
        %vm826 = vcmask 523264
        %v828 = vsel %vm826, %v816, 0
        %830 = vmatpush.msra.mxu0 0.0
        %831 = vmatpush.msra.mxu0 0.0
        %832 = vmatpush.msra.mxu0 0.0
        %833 = vmatpush.msra.mxu0 0.0
        %834 = vmatpush.msra.mxu0 0.0
        %835 = vmatpush.msra.mxu0 0.0
        %836 = vmatpush.msra.mxu0 0.0
        %837 = vmatpush.msra.mxu0 0.0
        %838 = vmatpush.msra.mxu0 %v824
        %839 = vmatpush.msra.mxu0 %v823
        %840 = vmatpush.msra.mxu0 %v822
        %841 = vmatpush.msra.mxu0 %v821
        %842 = vmatpush.msra.mxu0 %v820
        %843 = vmatpush.msra.mxu0 %v819
        %844 = vmatpush.msra.mxu0 %v818
        %845 = vmatpush.msra.mxu0 %v817
        %846 = vmatmul.f32.gmra.mxu0 %v828
        %v847 = vpop.f32.mrf.mxu0
        %v848 = vadd.f32 %v825, %v847
        %849 = vdwg.mxu0
        %v850 = vadd.f32 %v784, %v848
        %v851 = vsel %vm311, %v850, 0.0
        %852 = vadd.xlane.f32.xlu0 %v851
        %v853 = vpop.xlane.xlu0 %852
        %v854 = vmul.f32 %v853, %v761
        %v855 = vsub.f32 %v850, %v854
        %v856 = vmul.f32 %v855, %v855
        %v857 = vsel %vm311, %v856, 0.0
        %858 = vadd.xlane.f32.xlu0 %v857
        %v859 = vpop.xlane.xlu0 %858
        %v860 = vmul.f32 %v859, %v761
        %v861 = vadd.f32 %v860, 1e-05
        %v862 = vrsqrt.pop %v861
        %v863 = vmul.f32 %v862, %v861
        %v864 = vmul.f32 %v863, %v862
        %v865 = vmul.f32 0.5, %v864
        %v866 = vsub.f32 1.5, %v865
        %v867 = vmul.f32 %v862, %v866
        %vm868 = vweird.f32 %v861
        %vm869 = vweird.f32 %v862
        %vm870 = vmor %vm868, %vm869
        %v871 = vsel %vm870, %v862, %v867
        %v872 = vmul.f32 %v855, %v871
        %v873 = vperm.slane %v302, 3
        %v874 = vmul.f32 %v872, %v873
        %v875 = vperm.slane %v302, 4
        %v876 = vadd.f32 %v874, %v875
        %877 = vst.msk [vmem:[%s296] sm:$0xff] %vm311, %v876
        %s878 = sand.u32 %s203, 1
        %s879 = scalar_lea.sflag [#allocation3], %s878
        %s880 = sand.u32 %s203, 1
        %s881 = smul.addr %s880, 8
        %s882 = scalar_lea.vmem [#allocation2], %s881
        // Predicated region
        $region53: #{encoder_layer.1} parent=51 // pred_check
          %p883 = pneg %p213
        $region54: #{encoder_layer.1} parent=51 // pred_check_branch
          %885 = sbr.rel (%p883) target = $region56
        $region55: #{encoder_layer.1} parent=51 // pred_region
          %887 = vsyncadd %s879, 0
          %s888 = smul.addr %s22, 8
          %s889 = scalar_lea.hbm %s8, %s888
          %s891 = sshll.u32 %s882, 4
          %s892 = int_to_ptr.vmem [resolvable:$true] %s891
          %s893 = sshll.u32 %s889, 4
          %s894 = int_to_ptr.hbm [resolvable:$true] %s893
          %896 = dma.vmem_to_hbm [thread:$0]  %s892, 128, %s894, %s879
        $region56: #{encoder_layer.1} parent=51 // pred_fallthru
          _
      $region52: #{encoder_layer.1} parent=5 // pred_fallthru
        _
      %p897 = scmp.le.s32.totalorder 2, %s17
      // Predicated region
      $region57: #{encoder_layer.1} parent=5 // pred_check
        %p898 = pneg %p897
      $region58: #{encoder_layer.1} parent=5 // pred_check_branch
        %900 = sbr.rel (%p898) target = $region60
      $region59: #{encoder_layer.1} parent=5 // pred_region
        %s901 = ssub.s32 %s17, 2
        // Predicated region
        $region61: #{encoder_layer.1} parent=59 // pred_check
          %p902 = pneg %p219
        $region62: #{encoder_layer.1} parent=59 // pred_check_branch
          %904 = sbr.rel (%p902) target = $region64
        $region63: #{encoder_layer.1} parent=59 // pred_region
          %s905 = sand.u32 %s204, 1
          %s906 = scalar_lea.sflag [#allocation3], %s905
          %s907 = sand.u32 %s204, 1
          %s908 = smul.addr %s907, 8
          %s909 = scalar_lea.vmem [#allocation2], %s908
          %911 = dma.done %s906, 128
        $region64: #{encoder_layer.1} parent=59 // pred_fallthru
          _
      $region60: #{encoder_layer.1} parent=5 // pred_fallthru
        _
    $region6: #{encoder_layer.1} parent=1 // loop_footer
      %s21 = sadd.s32 1, %s17
    $region7: #{encoder_layer.1} parent=1 // loop_footer_branch
      %16 = sbr.rel target = $region3
    $region8: #{encoder_layer.1} parent=1 // loop_exit
      _
    %912 = vsyncpa [#allocation3], 1
    %s913 = scalar_lea.sflag [#allocation3], 1
    %914 = vsyncpa %s913, 1

</llo_original>
